<compile_context>
chip_gen: v7x
topology: tpu7x:2x2x1
jax: 0.10.0
libtpu: 0.0.40
codegen_flags: <defaults>
</compile_context>

<pallas_src>
import functools

import jax
import jax.numpy as jnp
from jax import lax
from jax.experimental import pallas as pl
from jax.experimental.pallas import tpu as pltpu


# ---------------------------------------------------------------------------
# Kernel 1: hoisted input projection  (T*B, D) @ (D, 4H) + b  ->  (T*B, 4H)
# ---------------------------------------------------------------------------
def input_proj_kernel(x_ref, w_ih_ref, b_ref, out_ref):
  out_ref[...] = (
      jnp.dot(x_ref[...], w_ih_ref[...], preferred_element_type=jnp.float32)
      + b_ref[...]
  ).astype(out_ref.dtype)


# ---------------------------------------------------------------------------
# Kernel 2: the LSTM recurrence only (single grid step, unrolled time loop).
#   Inputs:  gates_x (T, B, 4H) precomputed, w_hh (H, 4H), h0/c0 (B, H)
#   Outputs: h_seq (T, B, H), h_T (B, H), c_T (B, H)
# ---------------------------------------------------------------------------
def lstm_recurrence_kernel(gates_x_ref, w_hh_ref, h0_ref, c0_ref,
                           h_seq_ref, h_out_ref, c_out_ref,
                           *, seq_len, hidden_size):
  H = hidden_size
  w_hh = w_hh_ref[...]                       # resident in VMEM / vregs
  h = h0_ref[...]
  c = c0_ref[...]
  for t in range(seq_len):                   # static T -> fully unrolled
    gates = gates_x_ref[t] + jnp.dot(
        h, w_hh, preferred_element_type=jnp.float32)          # (B, 4H)
    # PyTorch gate ordering: [i | f | g | o]
    i_g = jax.nn.sigmoid(gates[:, 0 * H:1 * H])
    f_g = jax.nn.sigmoid(gates[:, 1 * H:2 * H])
    g_g = jnp.tanh(gates[:, 2 * H:3 * H])
    o_g = jax.nn.sigmoid(gates[:, 3 * H:4 * H])
    c = f_g * c + i_g * g_g
    h = o_g * jnp.tanh(c)
    h_seq_ref[t] = h
  h_out_ref[...] = h
  c_out_ref[...] = c


# ---------------------------------------------------------------------------
# Kernel 3: MLP heads + dueling combine over all T*B rows at once.
#   fc_adv and fc_val are fused into one (128, A+1) matmul.
# ---------------------------------------------------------------------------
def heads_kernel(h_ref, w_fc_ref, b_fc_ref, w_av_ref, b_av_ref, q_ref,
                 *, num_outputs):
  A = num_outputs
  fc = jnp.maximum(
      jnp.dot(h_ref[...], w_fc_ref[...], preferred_element_type=jnp.float32)
      + b_fc_ref[...],
      0.0,
  )                                                            # (TB, 128)
  av = jnp.dot(fc, w_av_ref[...], preferred_element_type=jnp.float32) \
      + b_av_ref[...]                                          # (TB, A+1)
  adv = av[:, :A]
  val = av[:, A:A + 1]
  q = val + (adv - jnp.mean(adv, axis=-1, keepdims=True))
  q_ref[...] = q.astype(q_ref.dtype)


# ---------------------------------------------------------------------------
# Wrapper
# ---------------------------------------------------------------------------
def r2d2_forward(x, params, hidden=None):
  """x: (B, T, D) float32, batch_first.  Returns (q (B,T,A), (h (1,B,H), c))."""
  B, T, D = x.shape
  H = params["w_hh"].shape[0]
  FC = params["w_fc"].shape[1]
  A = params["w_adv"].shape[1]
  TB = T * B

  if hidden is None:
    h0 = jnp.zeros((B, H), jnp.float32)
    c0 = jnp.zeros((B, H), jnp.float32)
  else:
    h0 = hidden[0].reshape(B, H)
    c0 = hidden[1].reshape(B, H)

  x_tbd = jnp.transpose(x, (1, 0, 2))              # time-major (T, B, D)
  x_flat = x_tbd.reshape(TB, D)                    # (T*B, D)

  full2 = lambda i: (0, 0)
  full3 = lambda i: (0, 0, 0)

  # ---- phase 1: hoisted input projection (one big matmul) ------------------
  gates_x_flat = pl.pallas_call(
      input_proj_kernel,
      out_shape=jax.ShapeDtypeStruct((TB, 4 * H), jnp.float32),
      grid=(1,),
      in_specs=[
          pl.BlockSpec((TB, D), full2),            # x
          pl.BlockSpec((D, 4 * H), full2),         # w_ih
          pl.BlockSpec((1, 4 * H), full2),         # b = b_ih + b_hh
      ],
      out_specs=pl.BlockSpec((TB, 4 * H), full2),
      compiler_params=pltpu.CompilerParams(dimension_semantics=("parallel",)),
  )(x_flat, params["w_ih"], params["b"])
  gates_x = gates_x_flat.reshape(T, B, 4 * H)

  # ---- phase 2: serial LSTM recurrence (single grid step) ------------------
  h_seq, h_T, c_T = pl.pallas_call(
      functools.partial(lstm_recurrence_kernel, seq_len=T, hidden_size=H),
      out_shape=(
          jax.ShapeDtypeStruct((T, B, H), jnp.float32),
          jax.ShapeDtypeStruct((B, H), jnp.float32),
          jax.ShapeDtypeStruct((B, H), jnp.float32),
      ),
      grid=(1,),
      in_specs=[
          pl.BlockSpec((T, B, 4 * H), full3),      # gates_x
          pl.BlockSpec((H, 4 * H), full2),         # w_hh
          pl.BlockSpec((B, H), full2),             # h0
          pl.BlockSpec((B, H), full2),             # c0
      ],
      out_specs=(
          pl.BlockSpec((T, B, H), full3),          # h_seq
          pl.BlockSpec((B, H), full2),             # h_T
          pl.BlockSpec((B, H), full2),             # c_T
      ),
      compiler_params=pltpu.CompilerParams(dimension_semantics=("arbitrary",)),
  )(gates_x, params["w_hh"], h0, c0)

  # ---- phase 3: MLP heads + dueling over all T*B rows ----------------------
  h_flat = h_seq.reshape(TB, H)
  w_av = jnp.concatenate([params["w_adv"], params["w_val"]], axis=1)  # (128, A+1)
  b_av = jnp.concatenate([params["b_adv"], params["b_val"]], axis=1)  # (1, A+1)

  q_flat = pl.pallas_call(
      functools.partial(heads_kernel, num_outputs=A),
      out_shape=jax.ShapeDtypeStruct((TB, A), jnp.float32),
      grid=(1,),
      in_specs=[
          pl.BlockSpec((TB, H), full2),            # h_seq flat
          pl.BlockSpec((H, FC), full2),            # w_fc
          pl.BlockSpec((1, FC), full2),            # b_fc
          pl.BlockSpec((FC, A + 1), full2),        # [w_adv | w_val]
          pl.BlockSpec((1, A + 1), full2),         # [b_adv | b_val]
      ],
      out_specs=pl.BlockSpec((TB, A), full2),
      compiler_params=pltpu.CompilerParams(dimension_semantics=("parallel",)),
  )(h_flat, params["w_fc"], params["b_fc"], w_av, b_av)

  q = q_flat.reshape(T, B, A).transpose(1, 0, 2)   # back to (B, T, A)
  return q, (h_T[None], c_T[None])                 # torch hidden is (1, B, H)


# ---------------------------------------------------------------------------
# Pure-JAX reference (lax.scan LSTM) for validation
# ---------------------------------------------------------------------------
def r2d2_reference(x, params, hidden=None):
  B, T, D = x.shape
  H = params["w_hh"].shape[0]
  if hidden is None:
    h0 = jnp.zeros((B, H), jnp.float32)
    c0 = jnp.zeros((B, H), jnp.float32)
  else:
    h0, c0 = hidden[0].reshape(B, H), hidden[1].reshape(B, H)

  def cell(carry, x_t):
    h, c = carry
    gates = x_t @ params["w_ih"] + h @ params["w_hh"] + params["b"][0]
    i = jax.nn.sigmoid(gates[:, 0 * H:1 * H])
    f = jax.nn.sigmoid(gates[:, 1 * H:2 * H])
    g = jnp.tanh(gates[:, 2 * H:3 * H])
    o = jax.nn.sigmoid(gates[:, 3 * H:4 * H])
    c_new = f * c + i * g
    h_new = o * jnp.tanh(c_new)
    return (h_new, c_new), h_new

  (h_T, c_T), hs = lax.scan(cell, (h0, c0), jnp.transpose(x, (1, 0, 2)))
  out = jnp.transpose(hs, (1, 0, 2))                 # (B, T, H)
  fc = jnp.maximum(out @ params["w_fc"] + params["b_fc"][0], 0.0)
  adv = fc @ params["w_adv"] + params["b_adv"][0]
  val = fc @ params["w_val"] + params["b_val"][0]
  q = val + (adv - adv.mean(axis=2, keepdims=True))
  return q, (h_T[None], c_T[None])


# ---------------------------------------------------------------------------
# Main
# ---------------------------------------------------------------------------
if __name__ == "__main__":
  # Small shapes consistent with the module: num_inputs=D, hidden_size=H,
  # fc width fixed at 128, num_outputs=A.
  B, T, D, H, A = 2, 8, 16, 32, 4

  key = jax.random.PRNGKey(0)
  ks = jax.random.split(key, 11)
  s = 0.1
  params = {
      "w_ih":  s * jax.random.normal(ks[0], (D, 4 * H), jnp.float32),
      "w_hh":  s * jax.random.normal(ks[1], (H, 4 * H), jnp.float32),
      # b = b_ih + b_hh (combined, same semantics as PyTorch's two biases)
      "b":     s * jax.random.normal(ks[2], (1, 4 * H), jnp.float32),
      "w_fc":  s * jax.random.normal(ks[3], (H, 128), jnp.float32),
      "b_fc":  s * jax.random.normal(ks[4], (1, 128), jnp.float32),
      "w_adv": s * jax.random.normal(ks[5], (128, A), jnp.float32),
      "b_adv": s * jax.random.normal(ks[6], (1, A), jnp.float32),
      "w_val": s * jax.random.normal(ks[7], (128, 1), jnp.float32),
      "b_val": s * jax.random.normal(ks[8], (1, 1), jnp.float32),
  }

  x = jax.random.normal(ks[9], (B, T, D), jnp.float32)
  h_init = 0.5 * jax.random.normal(ks[10], (1, B, H), jnp.float32)
  c_init = 0.5 * jax.random.normal(jax.random.PRNGKey(42), (1, B, H), jnp.float32)

  # Kernel run (with explicit initial hidden, like online_net(states, (h0,c0)))
  q, (h_T, c_T) = r2d2_forward(x, params, hidden=(h_init, c_init))
  jax.block_until_ready((q, h_T, c_T))

  # Validate against pure-JAX reference
  q_ref, (h_ref, c_ref) = r2d2_reference(x, params, hidden=(h_init, c_init))
  assert q.shape == (B, T, A)
  assert h_T.shape == (1, B, H) and c_T.shape == (1, B, H)
  assert jnp.allclose(q, q_ref, atol=1e-5), "qvalue mismatch"
  assert jnp.allclose(h_T, h_ref, atol=1e-5), "hidden mismatch"
  assert jnp.allclose(c_T, c_ref, atol=1e-5), "cell mismatch"

  # Also exercise the hidden=None path (defaults to zeros, like nn.LSTM)
  q0, (h0_T, c0_T) = r2d2_forward(x, params, hidden=None)
  q0_ref, _ = r2d2_reference(x, params, hidden=None)
  jax.block_until_ready(q0)
  assert jnp.allclose(q0, q0_ref, atol=1e-5), "qvalue mismatch (hidden=None)"

  print("KERNEL_OK")
</pallas_src>

<mosaic_0001>
module attributes {stable_mosaic.version = 11 : i64} {
  func.func @input_proj_kernel(%arg0: i32, %arg1: memref<16x16xf32, #tpu.memory_space<vmem>>, %arg2: memref<16x128xf32, #tpu.memory_space<vmem>>, %arg3: memref<1x128xf32, #tpu.memory_space<vmem>>, %arg4: memref<16x128xf32, #tpu.memory_space<vmem>>) attributes {dimension_semantics = [#tpu.dimension_semantics<parallel>], iteration_bounds = array<i64: 1>, scalar_prefetch = 0 : i64, scratch_operands = 0 : i64, tpu.core_type = #tpu.core_type<tc>, window_params = [{pipeline_mode = #tpu.pipeline_mode<synchronous>, transform_indices = @transform_0, window_bounds = array<i64: 16, 16>}, {pipeline_mode = #tpu.pipeline_mode<synchronous>, transform_indices = @transform_1, window_bounds = array<i64: 16, 128>}, {pipeline_mode = #tpu.pipeline_mode<synchronous>, transform_indices = @transform_2, window_bounds = array<i64: 1, 128>}, {pipeline_mode = #tpu.pipeline_mode<synchronous>, transform_indices = @transform_3, window_bounds = array<i64: 16, 128>}]} {
    %c0 = arith.constant 0 : index
    %c0_0 = arith.constant 0 : index
    %0 = vector.load %arg1[%c0, %c0_0] : memref<16x16xf32, #tpu.memory_space<vmem>>, vector<16x16xf32>
    %c0_1 = arith.constant 0 : index
    %c0_2 = arith.constant 0 : index
    %1 = vector.load %arg2[%c0_1, %c0_2] : memref<16x128xf32, #tpu.memory_space<vmem>>, vector<16x128xf32>
    %cst = arith.constant dense<0.000000e+00> : vector<16x128xf32>
    %2 = tpu.matmul %0, %1, %cst {dimension_numbers = #tpu.dot_dimension_numbers<[1], [0], [0], [1], [0, 0, 1, 1], [], []>} : vector<16x16xf32>, vector<16x128xf32>, vector<16x128xf32> -> vector<16x128xf32>
    %c0_3 = arith.constant 0 : index
    %c0_4 = arith.constant 0 : index
    %3 = vector.load %arg3[%c0_3, %c0_4] : memref<1x128xf32, #tpu.memory_space<vmem>>, vector<1x128xf32>
    %4 = vector.broadcast %3 : vector<1x128xf32> to vector<16x128xf32>
    %5 = arith.addf %2, %4 : vector<16x128xf32>
    %c0_5 = arith.constant 0 : index
    %c0_6 = arith.constant 0 : index
    %6 = vector.load %arg4[%c0_5, %c0_6] : memref<16x128xf32, #tpu.memory_space<vmem>>, vector<16x128xf32>
    tpu.vector_store %arg4[%c0_5, %c0_6], %5 {strides = array<i32>} : memref<16x128xf32, #tpu.memory_space<vmem>>, vector<16x128xf32>,
    return
  }
  func.func @transform_0(%arg0: i32) -> (i32, i32) {
    %c0_i32 = arith.constant 0 : i32
    %c0_i32_0 = arith.constant 0 : i32
    %c0_i32_1 = arith.constant 0 : i32
    return %c0_i32, %c0_i32_0 : i32, i32
  }
  func.func @transform_1(%arg0: i32) -> (i32, i32) {
    %c0_i32 = arith.constant 0 : i32
    %c0_i32_0 = arith.constant 0 : i32
    %c0_i32_1 = arith.constant 0 : i32
    return %c0_i32, %c0_i32_0 : i32, i32
  }
  func.func @transform_2(%arg0: i32) -> (i32, i32) {
    %c0_i32 = arith.constant 0 : i32
    %c0_i32_0 = arith.constant 0 : i32
    %c0_i32_1 = arith.constant 0 : i32
    return %c0_i32, %c0_i32_0 : i32, i32
  }
  func.func @transform_3(%arg0: i32) -> (i32, i32) {
    %c0_i32 = arith.constant 0 : i32
    %c0_i32_0 = arith.constant 0 : i32
    %c0_i32_1 = arith.constant 0 : i32
    return %c0_i32, %c0_i32_0 : i32, i32
  }
}

</mosaic_0001>

<llo_original>
// kernel: tpu_custom_call.1
$region0: #{tpu_custom_call.1}
  #allocation0 [shape = 'u32[]', space=smem, size = 0x4, offset = 0x4, fixed_abs, tag = 'smem constant byte address 0x4 - core index']
  #allocation1 [shape = 'u32[144,128]{1,0:T(1,128)}', space=vmem, size = 0x12000, scoped, tag = 'internal scratch']
  %s0 = inlined_call_operand.hbm [shape: f32[16,16], index: 0, kind: input, shape index: {}]
  %s1 = inlined_call_operand.hbm [shape: f32[16,128], index: 1, kind: input, shape index: {}]
  %s2 = inlined_call_operand.vmem [shape: f32[1,128], index: 2, kind: input, shape index: {}]
  %s3 = inlined_call_operand.hbm [shape: f32[16,128], index: 3, kind: output, shape index: {}]
  %s4 = sld [smem:[#allocation0]]
  $region30: #{tpu_custom_call.1} parent=0
    _
  %s6 = ssub.s32 1, %s4
  %s7 = scalar_select 0, %s6, %s4
  $region1: #{tpu_custom_call.1} parent=0
    #allocation2 [shape = 'u8[8192]{0}', space=vmem, size = 0x2000, scoped, tag = 'input window, operand 0, single buffered']
    #allocation3 [shape = 's32[1]{0}', space=sflag, size = 0x4, scoped, tag = 'scoped memory for tpu_custom_call.1']
    #allocation4 [shape = 's32[1]{0}', space=sflag, size = 0x4, scoped, tag = 'scoped memory for tpu_custom_call.1']
    #allocation5 [shape = 'u8[8192]{0}', space=vmem, size = 0x2000, scoped, tag = 'input window, operand 1, single buffered']
    #allocation6 [shape = 's32[1]{0}', space=sflag, size = 0x4, scoped, tag = 'scoped memory for tpu_custom_call.1']
    #allocation7 [shape = 'u8[8192]{0}', space=vmem, size = 0x2000, scoped, tag = 'output window, operand 0, single buffered']
    %8 = vsyncpa [#allocation3], 0
    %9 = vsyncpa [#allocation6], 0
    %10 = vsyncpa [#allocation4], 0
    // Predicated region
    $region2: #{tpu_custom_call.1} parent=1 // pred_check
      _
    $region3: #{tpu_custom_call.1} parent=1 // pred_check_branch
      %12 = sbr.rel (0) target = $region5
    $region4: #{tpu_custom_call.1} parent=1 // pred_region
      %s14 = ssub.s32 256, 256
      %15 = vsyncadd [#allocation3], %s14
      %s16 = sshll.u32 [#allocation2], 4
      %s17 = int_to_ptr.vmem [resolvable:$true] %s16
      %22 = dma.hbm_to_vmem [thread:$0]  %s0, 256, %s17, [#allocation3], 128, 128, 8
    $region5: #{tpu_custom_call.1} parent=1 // pred_fallthru
      _
    // Predicated region
    $region6: #{tpu_custom_call.1} parent=1 // pred_check
      _
    $region7: #{tpu_custom_call.1} parent=1 // pred_check_branch
      %24 = sbr.rel (0) target = $region9
    $region8: #{tpu_custom_call.1} parent=1 // pred_region
      %s26 = ssub.s32 256, 256
      %27 = vsyncadd [#allocation6], %s26
      %s28 = sshll.u32 [#allocation5], 4
      %s29 = int_to_ptr.vmem [resolvable:$true] %s28
      %34 = dma.hbm_to_vmem [thread:$0]  %s1, 256, %s29, [#allocation6], 128, 128, 8
    $region9: #{tpu_custom_call.1} parent=1 // pred_fallthru
      _
    // Predicated region
    $region10: #{tpu_custom_call.1} parent=1 // pred_check
      _
    $region11: #{tpu_custom_call.1} parent=1 // pred_check_branch
      %36 = sbr.rel (0) target = $region13
    $region12: #{tpu_custom_call.1} parent=1 // pred_region
      _
    $region13: #{tpu_custom_call.1} parent=1 // pred_fallthru
      _
    // Predicated region
    $region14: #{tpu_custom_call.1} parent=1 // pred_check
      _
    $region15: #{tpu_custom_call.1} parent=1 // pred_check_branch
      %38 = sbr.rel (0) target = $region17
    $region16: #{tpu_custom_call.1} parent=1 // pred_region
      %39 = dma.done [#allocation3], 256
    $region17: #{tpu_custom_call.1} parent=1 // pred_fallthru
      _
    // Predicated region
    $region18: #{tpu_custom_call.1} parent=1 // pred_check
      _
    $region19: #{tpu_custom_call.1} parent=1 // pred_check_branch
      %41 = sbr.rel (0) target = $region21
    $region20: #{tpu_custom_call.1} parent=1 // pred_region
      %42 = dma.done [#allocation6], 256
    $region21: #{tpu_custom_call.1} parent=1 // pred_fallthru
      _
    %v43 = vld [vmem:[#allocation2] sm:$0xff]
    %v44 = vld [vmem:[#allocation2 + $0x8] sm:$0xff]
    %v45 = vld [vmem:[#allocation5] sm:$0xff]
    %v46 = vld [vmem:[#allocation5 + $0x8] sm:$0xff]
    %v47 = vld [vmem:[%s2] sm:$0x1]
    %v49 = vlaneseq
    %v50 = vshrl.u32 %v49, 7
    %v51 = vsub.s32 0, %v50
    %v52 = vrot.slane %v47, %v51
    %vm54 = vcmask 130048
    %v56 = vsel %vm54, %v43, 0
    %v59 = vsel %vm54, %v44, 0
    %61 = vmatprep.subr.mxu0 0.0
    %62 = vmatpush1.msra.mxu0 %v45
    %63 = vmatprep.subr.mxu0 0.0
    %64 = vmatpush1.msra.mxu0 %v46
    %65 = vmatprep.subr.mxu0 0.0
    %66 = vmatpush1.msra.mxu0 0.0
    %67 = vmatprep.subr.mxu0 0.0
    %68 = vmatpush1.msra.mxu0 0.0
    %69 = vmatprep.subr.mxu0 0.0
    %70 = vmatpush1.msra.mxu0 0.0
    %71 = vmatprep.subr.mxu0 0.0
    %72 = vmatpush1.msra.mxu0 0.0
    %73 = vmatprep.subr.mxu0 0.0
    %74 = vmatpush1.msra.mxu0 0.0
    %75 = vmatprep.subr.mxu0 0.0
    %76 = vmatpush1.msra.mxu0 0.0
    %77 = vmatprep.subr.mxu0 0.0
    %78 = vmatpush1.msra.mxu0 0.0
    %79 = vmatprep.subr.mxu0 0.0
    %80 = vmatpush1.msra.mxu0 0.0
    %81 = vmatprep.subr.mxu0 0.0
    %82 = vmatpush1.msra.mxu0 0.0
    %83 = vmatprep.subr.mxu0 0.0
    %84 = vmatpush1.msra.mxu0 0.0
    %85 = vmatprep.subr.mxu0 0.0
    %86 = vmatpush1.msra.mxu0 0.0
    %87 = vmatprep.subr.mxu0 0.0
    %88 = vmatpush1.msra.mxu0 0.0
    %89 = vmatprep.subr.mxu0 0.0
    %90 = vmatpush1.msra.mxu0 0.0
    %91 = vmatprep.subr.mxu0 0.0
    %92 = vmatpush1.msra.mxu0 0.0
    %93 = vmatprep.subr.mxu0 0.0
    %94 = vmatpush1.msra.mxu0 0.0
    %95 = vmatprep.subr.mxu0 0.0
    %96 = vmatpush1.msra.mxu0 0.0
    %97 = vmatprep.subr.mxu0 0.0
    %98 = vmatpush1.msra.mxu0 0.0
    %99 = vmatprep.subr.mxu0 0.0
    %100 = vmatpush1.msra.mxu0 0.0
    %101 = vmatprep.subr.mxu0 0.0
    %102 = vmatpush1.msra.mxu0 0.0
    %103 = vmatprep.subr.mxu0 0.0
    %104 = vmatpush1.msra.mxu0 0.0
    %105 = vmatprep.subr.mxu0 0.0
    %106 = vmatpush1.msra.mxu0 0.0
    %107 = vmatprep.subr.mxu0 0.0
    %108 = vmatpush1.msra.mxu0 0.0
    %109 = vmatprep.subr.mxu0 0.0
    %110 = vmatpush1.msra.mxu0 0.0
    %111 = vmatprep.subr.mxu0 0.0
    %112 = vmatpush1.msra.mxu0 0.0
    %113 = vmatprep.subr.mxu0 0.0
    %114 = vmatpush1.msra.mxu0 0.0
    %115 = vmatprep.subr.mxu0 0.0
    %116 = vmatpush1.msra.mxu0 0.0
    %117 = vmatprep.subr.mxu0 0.0
    %118 = vmatpush1.msra.mxu0 0.0
    %119 = vmatprep.subr.mxu0 0.0
    %120 = vmatpush1.msra.mxu0 0.0
    %121 = vmatprep.subr.mxu0 0.0
    %122 = vmatpush1.msra.mxu0 0.0
    %123 = vmatprep.subr.mxu0 0.0
    %124 = vmatpush1.msra.mxu0 0.0
    %125 = vmatprep.mubr.f32.mxu0 0.0
    %126 = vmatmul.mubr.f32.gmra.mrb[0].mxu0 %v56
    %v127 = vpop.f32.mrb[0].mxu0
    %v128 = vadd.f32 %v52, %v127
    %v129 = vpop.f32.mrb[0].mxu0
    %130 = vmatprep.mubr.f32.mxu0 0.0
    %131 = vmatmul.mubr.f32.gmra.mrb[0].mxu0 %v59
    %v132 = vpop.f32.mrb[0].mxu0
    %v133 = vadd.f32 %v52, %v132
    %v134 = vpop.f32.mrb[0].mxu0
    %135 = vdwg.mxu0
    %136 = vst [vmem:[#allocation7] sm:$0xff] %v128
    %137 = vst [vmem:[#allocation7 + $0x8] sm:$0xff] %v133
    // Predicated region
    $region22: #{tpu_custom_call.1} parent=1 // pred_check
      _
    $region23: #{tpu_custom_call.1} parent=1 // pred_check_branch
      %139 = sbr.rel (0) target = $region25
    $region24: #{tpu_custom_call.1} parent=1 // pred_region
      %s141 = ssub.s32 256, 256
      %142 = vsyncadd [#allocation4], %s141
      %s143 = sshll.u32 [#allocation7], 4
      %s144 = int_to_ptr.vmem [resolvable:$true] %s143
      %149 = dma.vmem_to_hbm [thread:$0]  %s144, 256, %s3, [#allocation4], 128, 128, 8
    $region25: #{tpu_custom_call.1} parent=1 // pred_fallthru
      _
    // Predicated region
    $region26: #{tpu_custom_call.1} parent=1 // pred_check
      _
    $region27: #{tpu_custom_call.1} parent=1 // pred_check_branch
      %151 = sbr.rel (0) target = $region29
    $region28: #{tpu_custom_call.1} parent=1 // pred_region
      %152 = dma.done [#allocation4], 256
    $region29: #{tpu_custom_call.1} parent=1 // pred_fallthru
      _
    %153 = vsyncpa [#allocation3], 1
    %154 = vsyncpa [#allocation6], 1
    %155 = vsyncpa [#allocation4], 1

</llo_original>
